<compile_context>
chip_gen: v7x
topology: tpu7x:2x2x1
jax: 0.10.0
libtpu: 0.0.40
codegen_flags: <defaults>
</compile_context>

<pallas_src>
import functools

import jax
import jax.numpy as jnp
from jax.experimental import pallas as pl
from jax.experimental.pallas import tpu as pltpu

_LANE = 128


def _round_up(a, b):
    return (a + b - 1) // b * b


def _gap3d_single_kernel(x_ref, o_ref, *, inv_s):
    # Whole spatial extent in one block: one cross-lane reduce per row tile
    # (unavoidable), scale by the true 1/S, cast back to the input dtype.
    x = x_ref[...].astype(jnp.float32)
    o_ref[...] = (jnp.sum(x, axis=-1, keepdims=True)
                  * jnp.float32(inv_s)).astype(o_ref.dtype)


def _gap3d_tiled_kernel(x_ref, o_ref, acc_ref, *, ts, total_s, lane_groups,
                        mask_tail, inv_s):
    # Grid = (row_tiles, spatial_tiles); axis 1 is the reduction axis.
    k = pl.program_id(1)
    last = pl.num_programs(1) - 1

    @pl.when(k == 0)
    def _init():
        acc_ref[...] = jnp.zeros_like(acc_ref)

    def _accumulate(x):
        # Fold the (TR, ts) tile into the (TR, 128) accumulator using static,
        # 128-lane-aligned slices: pure VPU adds, no per-tile XLU reduction.
        partial = acc_ref[...]
        for g in range(lane_groups):
            partial = partial + x[:, g * _LANE:(g + 1) * _LANE]
        acc_ref[...] = partial

    if mask_tail:
        # Ragged spatial tail: emit the iota/compare/select only on the last
        # spatial tile; every other tile takes the unmasked fast path.
        @pl.when(k != last)
        def _body():
            _accumulate(x_ref[...].astype(jnp.float32))

        @pl.when(k == last)
        def _body_tail():
            x = x_ref[...].astype(jnp.float32)
            col = jax.lax.broadcasted_iota(jnp.int32, x.shape, 1)
            x = jnp.where(col + k * ts < total_s, x, 0.0)
            _accumulate(x)
    else:
        _accumulate(x_ref[...].astype(jnp.float32))

    @pl.when(k == last)
    def _finalize():
        # Single deferred cross-lane reduce + scale + cast per row tile.
        row_sum = jnp.sum(acc_ref[...], axis=-1, keepdims=True)
        o_ref[...] = (row_sum * jnp.float32(inv_s)).astype(o_ref.dtype)


def global_avg_pool3d(x, *, block_budget_bytes=8 << 20, ts_lane_cap=2048,
                      tr_cap=4096):
    """x: (N, C, D, H, W) -> (N, C), mean over the spatial dims."""
    N, C, D, H, W = x.shape
    R = N * C
    S = D * H * W
    x2 = x.reshape(R, S)

    itemsize = x.dtype.itemsize
    # Sublane packing: 8 rows for 32-bit, 16 for 16-bit, 32 for 8-bit dtypes.
    sublane = max(8, 32 // max(itemsize, 1))

    # --- Spatial tile -------------------------------------------------------
    # Whole extent when it fits in one lane-capped tile (full-dim blocks are
    # exempt from the 128 rule); otherwise a 128-multiple chunk whose ragged
    # tail is masked in-kernel (on the last tile only).
    if S <= ts_lane_cap:
        ts = S
    else:
        ts = ts_lane_cap                      # multiple of 128 by construction
    num_s_tiles = pl.cdiv(S, ts)
    mask_tail = (S % ts) != 0
    padded_ts = _round_up(ts, _LANE)          # VMEM lane padding

    # --- Row tile from a VMEM byte budget ----------------------------------
    tr = block_budget_bytes // (padded_ts * itemsize)
    tr = max(sublane, (tr // sublane) * sublane)
    tr = min(tr, tr_cap, _round_up(R, sublane))
    num_row_tiles = pl.cdiv(R, tr)

    # v7x megacore: guarantee >=2 tiles on the "parallel" row axis when the
    # row count allows it, so both TensorCores get work.
    if num_row_tiles == 1 and R > sublane:
        tr = _round_up(pl.cdiv(R, 2), sublane)
        num_row_tiles = pl.cdiv(R, tr)

    # --- VMEM limit: actual footprint * 2 margin, capped for v7x (64 MiB) ---
    vmem_need = (2 * tr * padded_ts * itemsize      # double-buffered input
                 + 2 * tr * _LANE * itemsize        # lane-padded output blocks
                 + tr * _LANE * 4)                  # f32 accumulator scratch
    vmem_limit = int(min(56 << 20, max(32 << 20, 2 * vmem_need + (4 << 20))))

    cost = pl.CostEstimate(
        flops=R * S, transcendentals=0,
        bytes_accessed=R * S * itemsize + R * itemsize)

    out_shape = jax.ShapeDtypeStruct((num_row_tiles * tr, 1), x.dtype)

    if num_s_tiles == 1:
        out = pl.pallas_call(
            functools.partial(_gap3d_single_kernel, inv_s=1.0 / S),
            out_shape=out_shape,
            grid_spec=pltpu.PrefetchScalarGridSpec(
                num_scalar_prefetch=0,
                grid=(num_row_tiles,),
                in_specs=[pl.BlockSpec((tr, ts), lambda i: (i, 0))],
                out_specs=pl.BlockSpec((tr, 1), lambda i: (i, 0)),
            ),
            compiler_params=pltpu.CompilerParams(
                dimension_semantics=("parallel",),
                vmem_limit_bytes=vmem_limit),
            cost_estimate=cost,
        )(x2)
    else:
        assert ts % _LANE == 0
        kernel = functools.partial(
            _gap3d_tiled_kernel, ts=ts, total_s=S, lane_groups=ts // _LANE,
            mask_tail=mask_tail, inv_s=1.0 / S)
        out = pl.pallas_call(
            kernel,
            out_shape=out_shape,
            grid_spec=pltpu.PrefetchScalarGridSpec(
                num_scalar_prefetch=0,
                grid=(num_row_tiles, num_s_tiles),
                in_specs=[pl.BlockSpec((tr, ts), lambda i, k: (i, k))],
                out_specs=pl.BlockSpec((tr, 1), lambda i, k: (i, 0)),
                scratch_shapes=[pltpu.VMEM((tr, _LANE), jnp.float32)],
            ),
            compiler_params=pltpu.CompilerParams(
                dimension_semantics=("parallel", "arbitrary"),
                vmem_limit_bytes=vmem_limit),
            cost_estimate=cost,
        )(x2)

    # Drop padded tail rows (if any) and restore (N, C).
    return out.reshape(-1)[:R].reshape(N, C)


if __name__ == "__main__":
    key = jax.random.PRNGKey(0)
    k0, k1, k2, k3 = jax.random.split(key, 4)

    # Primary example consistent with a 3-D pooling module: (N, C, D, H, W).
    # S = 512 -> single-spatial-tile path, 1-D grid.
    x = jax.random.normal(k0, (2, 4, 8, 8, 8), dtype=jnp.float32)
    y = global_avg_pool3d(x)
    jax.block_until_ready(y)
    y_ref = jnp.mean(x, axis=(2, 3, 4))
    assert y.shape == (2, 4)
    assert jnp.allclose(y, y_ref, atol=1e-5, rtol=1e-5)

    # Multi-spatial-tile path with ragged tail AND multiple row tiles:
    # R=32, S=2205 -> ts=2048 (2 tiles, masked tail); row axis split 32->16x2
    # so the "parallel" axis has >=2 tiles (megacore path).
    x2 = jax.random.normal(k1, (2, 16, 5, 21, 21), dtype=jnp.float32)
    y2 = global_avg_pool3d(x2)
    jax.block_until_ready(y2)
    y2_ref = jnp.mean(x2, axis=(2, 3, 4))
    assert y2.shape == (2, 16)
    assert jnp.allclose(y2, y2_ref, atol=1e-5, rtol=1e-5)

    # Small ragged-row case (R=6 padded to 8 rows) on the tiled path.
    x3 = jax.random.normal(k2, (2, 3, 5, 21, 21), dtype=jnp.float32)
    y3 = global_avg_pool3d(x3)
    jax.block_until_ready(y3)
    y3_ref = jnp.mean(x3, axis=(2, 3, 4))
    assert y3.shape == (2, 3)
    assert jnp.allclose(y3, y3_ref, atol=1e-5, rtol=1e-5)

    # bf16 input: widened to f32 inside the kernel, output back in bf16.
    x4 = jax.random.normal(k3, (2, 4, 8, 8, 8), dtype=jnp.bfloat16)
    y4 = global_avg_pool3d(x4)
    jax.block_until_ready(y4)
    y4_ref = jnp.mean(x4.astype(jnp.float32), axis=(2, 3, 4))
    assert y4.dtype == jnp.bfloat16
    assert jnp.allclose(y4.astype(jnp.float32), y4_ref, atol=1e-2, rtol=1e-2)

    print("KERNEL_OK")
</pallas_src>

<mosaic_0001>
module attributes {stable_mosaic.version = 11 : i64} {
  func.func @_gap3d_single_kernel(%arg0: i32, %arg1: memref<8x512xf32, #tpu.memory_space<vmem>>, %arg2: memref<8x1xf32, #tpu.memory_space<vmem>>) attributes {dimension_semantics = [#tpu.dimension_semantics<parallel>], iteration_bounds = array<i64: 1>, scalar_prefetch = 0 : i64, scratch_operands = 0 : i64, tpu.core_type = #tpu.core_type<tc>, window_params = [{transform_indices = @transform_0, window_bounds = array<i64: 8, 512>}, {transform_indices = @transform_1, window_bounds = array<i64: 8, 1>}]} {
    %c0 = arith.constant 0 : index
    %c0_0 = arith.constant 0 : index
    %0 = vector.load %arg1[%c0, %c0_0] : memref<8x512xf32, #tpu.memory_space<vmem>>, vector<8x512xf32>
    %cst = arith.constant dense<0.000000e+00> : vector<8xf32>
    %1 = vector.multi_reduction <add>, %0, %cst [1] : vector<8x512xf32> to vector<8xf32>
    %2 = vector.shape_cast %1 : vector<8xf32> to vector<8x1xf32>
    %cst_1 = arith.constant 0.001953125 : f32
    %3 = vector.broadcast %cst_1 : f32 to vector<8x1xf32>
    %4 = arith.mulf %2, %3 : vector<8x1xf32>
    %c0_2 = arith.constant 0 : index
    %c0_3 = arith.constant 0 : index
    %5 = vector.load %arg2[%c0_2, %c0_3] : memref<8x1xf32, #tpu.memory_space<vmem>>, vector<8x1xf32>
    tpu.vector_store %arg2[%c0_2, %c0_3], %4 {strides = array<i32>} : memref<8x1xf32, #tpu.memory_space<vmem>>, vector<8x1xf32>,
    return
  }
  func.func @transform_0(%arg0: i32) -> (i32, i32) {
    %c0_i32 = arith.constant 0 : i32
    %c0_i32_0 = arith.constant 0 : i32
    return %arg0, %c0_i32 : i32, i32
  }
  func.func @transform_1(%arg0: i32) -> (i32, i32) {
    %c0_i32 = arith.constant 0 : i32
    %c0_i32_0 = arith.constant 0 : i32
    return %arg0, %c0_i32 : i32, i32
  }
}

</mosaic_0001>

<llo_original>
// kernel: tpu_custom_call.1
$region0: #{tpu_custom_call.1}
  #allocation0 [shape = 'u32[]', space=smem, size = 0x4, offset = 0x4, fixed_abs, tag = 'smem constant byte address 0x4 - core index']
  #allocation1 [shape = 'u32[144,128]{1,0:T(1,128)}', space=vmem, size = 0x12000, scoped, tag = 'internal scratch']
  %s0 = inlined_call_operand.hbm [shape: f32[8,512], index: 0, kind: input, shape index: {}]
  %s1 = inlined_call_operand.vmem [shape: f32[8,1], index: 1, kind: output, shape index: {}]
  %s2 = sld [smem:[#allocation0]]
  $region18: #{tpu_custom_call.1} parent=0
    _
  %s4 = ssub.s32 1, %s2
  %s5 = scalar_select 0, %s4, %s2
  $region1: #{tpu_custom_call.1} parent=0
    #allocation2 [shape = 'u8[16384]{0}', space=vmem, size = 0x4000, scoped, tag = 'input window, operand 0, single buffered']
    #allocation3 [shape = 's32[1]{0}', space=sflag, size = 0x4, scoped, tag = 'scoped memory for tpu_custom_call.1']
    %6 = vsyncpa [#allocation3], 0
    // Predicated region
    $region2: #{tpu_custom_call.1} parent=1 // pred_check
      _
    $region3: #{tpu_custom_call.1} parent=1 // pred_check_branch
      %8 = sbr.rel (0) target = $region5
    $region4: #{tpu_custom_call.1} parent=1 // pred_region
      %s10 = ssub.s32 512, 512
      %11 = vsyncadd [#allocation3], %s10
      %s13 = sshll.u32 [#allocation2], 4
      %s14 = int_to_ptr.vmem [resolvable:$true] %s13
      %16 = dma.hbm_to_vmem [thread:$0]  %s0, 512, %s14, [#allocation3]
    $region5: #{tpu_custom_call.1} parent=1 // pred_fallthru
      _
    // Predicated region
    $region6: #{tpu_custom_call.1} parent=1 // pred_check
      _
    $region7: #{tpu_custom_call.1} parent=1 // pred_check_branch
      %18 = sbr.rel (0) target = $region9
    $region8: #{tpu_custom_call.1} parent=1 // pred_region
      %19 = dma.done [#allocation3], 512
    $region9: #{tpu_custom_call.1} parent=1 // pred_fallthru
      _
    %v20 = vld [vmem:[#allocation2] sm:$0xff]
    %v21 = vld [vmem:[#allocation2 + $0x8] sm:$0xff]
    %v22 = vld [vmem:[#allocation2 + $0x10] sm:$0xff]
    %v23 = vld [vmem:[#allocation2 + $0x18] sm:$0xff]
    %v24 = vadd.f32 %v20, %v21
    %v25 = vadd.f32 %v24, %v22
    %v26 = vadd.f32 %v25, %v23
    %27 = vadd.xlane.f32.xlu0 %v26
    %v28 = vpop.xlane.xlu0 %27
    %v29 = vmul.f32 %v28, 0.001953125
    %vm30 = vcmask 7168
    %31 = vst.msk [vmem:[%s1] sm:$0xff] %vm30, %v29
    // Predicated region
    $region10: #{tpu_custom_call.1} parent=1 // pred_check
      _
    $region11: #{tpu_custom_call.1} parent=1 // pred_check_branch
      %33 = sbr.rel (0) target = $region13
    $region12: #{tpu_custom_call.1} parent=1 // pred_region
      _
    $region13: #{tpu_custom_call.1} parent=1 // pred_fallthru
      _
    // Predicated region
    $region14: #{tpu_custom_call.1} parent=1 // pred_check
      _
    $region15: #{tpu_custom_call.1} parent=1 // pred_check_branch
      %35 = sbr.rel (0) target = $region17
    $region16: #{tpu_custom_call.1} parent=1 // pred_region
      _
    $region17: #{tpu_custom_call.1} parent=1 // pred_fallthru
      _
    %36 = vsyncpa [#allocation3], 1

</llo_original>
